<compile_context>
chip_gen: v6e
topology: v6e:2x2x1
jax: 0.10.0
libtpu: 0.0.40
codegen_flags: <defaults>
</compile_context>

<pallas_src>
import functools

import jax
import jax.numpy as jnp
from jax.experimental import pallas as pl
from jax.experimental.pallas import tpu as pltpu


def _resblock_kernel(x_ref, w_ref, b_ref, o_ref, *, H, W):
    """One batch element: o = conv3x3_same(x) + bias + x, NCHW-flat layout.

    x_ref: (1, C,    H*W)  input block (also the residual branch)
    w_ref: (9, Cout, C)    conv taps, tap index t = kh*3 + kw
    b_ref: (Cout, 1)       bias (broadcast along lanes)
    o_ref: (1, Cout, H*W)  lane-dense NCHW-flat output
    """
    C = x_ref.shape[1]
    HW = x_ref.shape[2]

    x = x_ref[0]                                  # (C, H*W)
    xf = x.astype(jnp.float32)

    # Flat spatial index / in-row column index for the 3x3 edge masks.
    p = jax.lax.broadcasted_iota(jnp.int32, (C, HW), 1)
    col = p % W

    # Residual + bias seed the f32 accumulator (Cout == C).
    acc = xf + b_ref[...].astype(jnp.float32)     # (Cout, H*W)

    # 9 taps: lane roll (XLU) + edge mask (VPU) + small MXU dot, f32 accumulate.
    for t in range(9):
        dh = t // 3 - 1
        dw = t % 3 - 1
        s = dh * W + dw                           # tap[p] = x[p + s] where valid
        tap = xf if s == 0 else pltpu.roll(xf, shift=(-s) % HW, axis=1)
        conds = []
        if dh < 0:
            conds.append(p >= W)                  # h - 1 >= 0
        elif dh > 0:
            conds.append(p < (H - 1) * W)         # h + 1 <= H - 1
        if dw < 0:
            conds.append(col >= 1)                # w - 1 >= 0
        elif dw > 0:
            conds.append(col < W - 1)             # w + 1 <= W - 1
        if conds:
            mask = conds[0]
            for extra in conds[1:]:
                mask = mask & extra
            tap = jnp.where(mask, tap, 0.0)
        acc = acc + jnp.dot(w_ref[t].astype(jnp.float32), tap,
                            preferred_element_type=jnp.float32)

    o_ref[0] = acc.astype(o_ref.dtype)


def resblock_conv3x3(x_nchw, w_oihw, bias):
    """y = conv3x3_same(x) + x, matching ResBlock(nn.Conv2d(C, C, 3, padding=1))."""
    N, C, H, W = x_nchw.shape
    Cout = w_oihw.shape[0]
    assert Cout == C, "residual add requires C_out == C_in"
    HW = H * W

    # Free (contiguous) reshapes only -- no wrapper-side transposes of x.
    x_flat = x_nchw.reshape(N, C, HW)
    # OIHW -> (kh, kw, Cout, C) -> (9, Cout, C); tiny (9*Cout*C) tensor.
    w_taps = jnp.transpose(w_oihw, (2, 3, 0, 1)).reshape(9, Cout, C)
    b2d = bias.reshape(Cout, 1)

    out_flat = pl.pallas_call(
        functools.partial(_resblock_kernel, H=H, W=W),
        out_shape=jax.ShapeDtypeStruct((N, Cout, HW), x_nchw.dtype),
        grid_spec=pltpu.PrefetchScalarGridSpec(
            num_scalar_prefetch=0,
            grid=(N,),
            in_specs=[
                pl.BlockSpec((1, C, HW), lambda n: (n, 0, 0)),
                pl.BlockSpec((9, Cout, C), lambda n: (0, 0, 0)),
                pl.BlockSpec((Cout, 1), lambda n: (0, 0)),
            ],
            out_specs=pl.BlockSpec((1, Cout, HW), lambda n: (n, 0, 0)),
        ),
        compiler_params=pltpu.CompilerParams(
            dimension_semantics=("parallel",),
            vmem_limit_bytes=32 * 1024 * 1024,
        ),
    )(x_flat, w_taps, b2d)

    # Free reshape back to NCHW.
    return out_flat.reshape(N, Cout, H, W)


def _reference(x_nchw, w_oihw, bias):
    y = jax.lax.conv_general_dilated(
        x_nchw, w_oihw,
        window_strides=(1, 1),
        padding="SAME",
        dimension_numbers=("NCHW", "OIHW", "NCHW"),
    )
    return y + bias.reshape(1, -1, 1, 1) + x_nchw


if __name__ == "__main__":
    key = jax.random.PRNGKey(0)
    kx, kw, kb = jax.random.split(key, 3)

    N, C, H, W = 2, 4, 16, 16
    x = jax.random.normal(kx, (N, C, H, W), dtype=jnp.float32)
    # Deterministic init of the wrapped conv `m` (PyTorch weight layout OIHW).
    w = jax.random.normal(kw, (C, C, 3, 3), dtype=jnp.float32) * 0.1
    b = jax.random.normal(kb, (C,), dtype=jnp.float32) * 0.1

    y = resblock_conv3x3(x, w, b)
    jax.block_until_ready(y)

    y_ref = _reference(x, w, b)
    assert y.shape == (N, C, H, W)
    assert jnp.allclose(y, y_ref, atol=1e-4, rtol=1e-4), "mismatch vs reference"

    print("KERNEL_OK")
</pallas_src>

<mosaic_0001>
module attributes {stable_mosaic.version = 11 : i64} {
  func.func @_resblock_kernel(%arg0: i32, %arg1: memref<1x4x256xf32, #tpu.memory_space<vmem>>, %arg2: memref<9x4x4xf32, #tpu.memory_space<vmem>>, %arg3: memref<4x1xf32, #tpu.memory_space<vmem>>, %arg4: memref<1x4x256xf32, #tpu.memory_space<vmem>>) attributes {dimension_semantics = [#tpu.dimension_semantics<parallel>], iteration_bounds = array<i64: 2>, scalar_prefetch = 0 : i64, scratch_operands = 0 : i64, tpu.core_type = #tpu.core_type<tc>, window_params = [{transform_indices = @transform_0, window_bounds = array<i64: 1, 4, 256>}, {pipeline_mode = #tpu.pipeline_mode<synchronous>, transform_indices = @transform_1, window_bounds = array<i64: 9, 4, 4>}, {pipeline_mode = #tpu.pipeline_mode<synchronous>, transform_indices = @transform_2, window_bounds = array<i64: 4, 1>}, {transform_indices = @transform_3, window_bounds = array<i64: 1, 4, 256>}]} {
    %c0 = arith.constant 0 : index
    %c0_0 = arith.constant 0 : index
    %c0_1 = arith.constant 0 : index
    %0 = vector.load %arg1[%c0, %c0_0, %c0_1] : memref<1x4x256xf32, #tpu.memory_space<vmem>>, vector<1x4x256xf32>
    %1 = vector.shape_cast %0 : vector<1x4x256xf32> to vector<4x256xf32>
    %2 = tpu.iota {dimensions = array<i32: 1>} : vector<4x256xi32>
    %c16_i32 = arith.constant 16 : i32
    %c0_i32 = arith.constant 0 : i32
    %3 = arith.cmpi eq, %c16_i32, %c0_i32 : i32
    %c1_i32 = arith.constant 1 : i32
    %4 = arith.select %3, %c1_i32, %c16_i32 : i32
    %5 = vector.broadcast %4 : i32 to vector<4x256xi32>
    %6 = arith.remsi %2, %5 : vector<4x256xi32>
    %c0_i32_2 = arith.constant 0 : i32
    %7 = vector.broadcast %c0_i32_2 : i32 to vector<4x256xi32>
    %8 = arith.cmpi ne, %6, %7 : vector<4x256xi32>
    %c0_i32_3 = arith.constant 0 : i32
    %9 = vector.broadcast %c0_i32_3 : i32 to vector<4x256xi32>
    %10 = arith.cmpi slt, %6, %9 : vector<4x256xi32>
    %c0_i32_4 = arith.constant 0 : i32
    %11 = arith.cmpi slt, %4, %c0_i32_4 : i32
    %12 = vector.broadcast %11 : i1 to vector<4x256xi1>
    %13 = vector.broadcast %12 : vector<4x256xi1> to vector<4x256xi1>
    %14 = arith.xori %10, %13 : vector<4x256xi1>
    %15 = arith.andi %14, %8 : vector<4x256xi1>
    %16 = vector.broadcast %4 : i32 to vector<4x256xi32>
    %17 = arith.addi %6, %16 : vector<4x256xi32>
    %18 = arith.select %15, %17, %6 : vector<4x256xi1>, vector<4x256xi32>
    %c0_5 = arith.constant 0 : index
    %c0_6 = arith.constant 0 : index
    %19 = vector.load %arg3[%c0_5, %c0_6] : memref<4x1xf32, #tpu.memory_space<vmem>>, vector<4x1xf32>
    %20 = vector.broadcast %19 : vector<4x1xf32> to vector<4x256xf32>
    %21 = arith.addf %1, %20 : vector<4x256xf32>
    %c17_i32 = arith.constant 17 : i32
    %22 = tpu.dynamic_rotate %1 by %c17_i32 dim 1 : vector<4x256xf32>, i32 -> vector<4x256xf32>
    %c16_i32_7 = arith.constant 16 : i32
    %23 = vector.broadcast %c16_i32_7 : i32 to vector<4x256xi32>
    %24 = arith.cmpi sge, %2, %23 : vector<4x256xi32>
    %c1_i32_8 = arith.constant 1 : i32
    %25 = vector.broadcast %c1_i32_8 : i32 to vector<4x256xi32>
    %26 = arith.cmpi sge, %18, %25 : vector<4x256xi32>
    %27 = arith.andi %24, %26 : vector<4x256xi1>
    %cst = arith.constant 0.000000e+00 : f32
    %28 = vector.broadcast %cst : f32 to vector<4x256xf32>
    %29 = arith.select %27, %22, %28 : vector<4x256xi1>, vector<4x256xf32>
    %c0_9 = arith.constant 0 : index
    %c0_10 = arith.constant 0 : index
    %c0_11 = arith.constant 0 : index
    %30 = vector.load %arg2[%c0_9, %c0_10, %c0_11] : memref<9x4x4xf32, #tpu.memory_space<vmem>>, vector<1x4x4xf32>
    %31 = vector.shape_cast %30 : vector<1x4x4xf32> to vector<4x4xf32>
    %cst_12 = arith.constant dense<0.000000e+00> : vector<4x256xf32>
    %32 = tpu.matmul %31, %29, %cst_12 {dimension_numbers = #tpu.dot_dimension_numbers<[1], [0], [0], [1], [0, 0, 1, 1], [], []>} : vector<4x4xf32>, vector<4x256xf32>, vector<4x256xf32> -> vector<4x256xf32>
    %33 = arith.addf %21, %32 : vector<4x256xf32>
    %c16_i32_13 = arith.constant 16 : i32
    %34 = tpu.dynamic_rotate %1 by %c16_i32_13 dim 1 : vector<4x256xf32>, i32 -> vector<4x256xf32>
    %c16_i32_14 = arith.constant 16 : i32
    %35 = vector.broadcast %c16_i32_14 : i32 to vector<4x256xi32>
    %36 = arith.cmpi sge, %2, %35 : vector<4x256xi32>
    %cst_15 = arith.constant 0.000000e+00 : f32
    %37 = vector.broadcast %cst_15 : f32 to vector<4x256xf32>
    %38 = arith.select %36, %34, %37 : vector<4x256xi1>, vector<4x256xf32>
    %c1 = arith.constant 1 : index
    %c0_16 = arith.constant 0 : index
    %c0_17 = arith.constant 0 : index
    %39 = vector.load %arg2[%c1, %c0_16, %c0_17] : memref<9x4x4xf32, #tpu.memory_space<vmem>>, vector<1x4x4xf32>
    %40 = vector.shape_cast %39 : vector<1x4x4xf32> to vector<4x4xf32>
    %cst_18 = arith.constant dense<0.000000e+00> : vector<4x256xf32>
    %41 = tpu.matmul %40, %38, %cst_18 {dimension_numbers = #tpu.dot_dimension_numbers<[1], [0], [0], [1], [0, 0, 1, 1], [], []>} : vector<4x4xf32>, vector<4x256xf32>, vector<4x256xf32> -> vector<4x256xf32>
    %42 = arith.addf %33, %41 : vector<4x256xf32>
    %c15_i32 = arith.constant 15 : i32
    %43 = tpu.dynamic_rotate %1 by %c15_i32 dim 1 : vector<4x256xf32>, i32 -> vector<4x256xf32>
    %c16_i32_19 = arith.constant 16 : i32
    %44 = vector.broadcast %c16_i32_19 : i32 to vector<4x256xi32>
    %45 = arith.cmpi sge, %2, %44 : vector<4x256xi32>
    %c15_i32_20 = arith.constant 15 : i32
    %46 = vector.broadcast %c15_i32_20 : i32 to vector<4x256xi32>
    %47 = arith.cmpi slt, %18, %46 : vector<4x256xi32>
    %48 = arith.andi %45, %47 : vector<4x256xi1>
    %cst_21 = arith.constant 0.000000e+00 : f32
    %49 = vector.broadcast %cst_21 : f32 to vector<4x256xf32>
    %50 = arith.select %48, %43, %49 : vector<4x256xi1>, vector<4x256xf32>
    %c2 = arith.constant 2 : index
    %c0_22 = arith.constant 0 : index
    %c0_23 = arith.constant 0 : index
    %51 = vector.load %arg2[%c2, %c0_22, %c0_23] : memref<9x4x4xf32, #tpu.memory_space<vmem>>, vector<1x4x4xf32>
    %52 = vector.shape_cast %51 : vector<1x4x4xf32> to vector<4x4xf32>
    %cst_24 = arith.constant dense<0.000000e+00> : vector<4x256xf32>
    %53 = tpu.matmul %52, %50, %cst_24 {dimension_numbers = #tpu.dot_dimension_numbers<[1], [0], [0], [1], [0, 0, 1, 1], [], []>} : vector<4x4xf32>, vector<4x256xf32>, vector<4x256xf32> -> vector<4x256xf32>
    %54 = arith.addf %42, %53 : vector<4x256xf32>
    %c1_i32_25 = arith.constant 1 : i32
    %55 = tpu.dynamic_rotate %1 by %c1_i32_25 dim 1 : vector<4x256xf32>, i32 -> vector<4x256xf32>
    %c1_i32_26 = arith.constant 1 : i32
    %56 = vector.broadcast %c1_i32_26 : i32 to vector<4x256xi32>
    %57 = arith.cmpi sge, %18, %56 : vector<4x256xi32>
    %cst_27 = arith.constant 0.000000e+00 : f32
    %58 = vector.broadcast %cst_27 : f32 to vector<4x256xf32>
    %59 = arith.select %57, %55, %58 : vector<4x256xi1>, vector<4x256xf32>
    %c3 = arith.constant 3 : index
    %c0_28 = arith.constant 0 : index
    %c0_29 = arith.constant 0 : index
    %60 = vector.load %arg2[%c3, %c0_28, %c0_29] : memref<9x4x4xf32, #tpu.memory_space<vmem>>, vector<1x4x4xf32>
    %61 = vector.shape_cast %60 : vector<1x4x4xf32> to vector<4x4xf32>
    %cst_30 = arith.constant dense<0.000000e+00> : vector<4x256xf32>
    %62 = tpu.matmul %61, %59, %cst_30 {dimension_numbers = #tpu.dot_dimension_numbers<[1], [0], [0], [1], [0, 0, 1, 1], [], []>} : vector<4x4xf32>, vector<4x256xf32>, vector<4x256xf32> -> vector<4x256xf32>
    %63 = arith.addf %54, %62 : vector<4x256xf32>
    %c4 = arith.constant 4 : index
    %c0_31 = arith.constant 0 : index
    %c0_32 = arith.constant 0 : index
    %64 = vector.load %arg2[%c4, %c0_31, %c0_32] : memref<9x4x4xf32, #tpu.memory_space<vmem>>, vector<1x4x4xf32>
    %65 = vector.shape_cast %64 : vector<1x4x4xf32> to vector<4x4xf32>
    %cst_33 = arith.constant dense<0.000000e+00> : vector<4x256xf32>
    %66 = tpu.matmul %65, %1, %cst_33 {dimension_numbers = #tpu.dot_dimension_numbers<[1], [0], [0], [1], [0, 0, 1, 1], [], []>} : vector<4x4xf32>, vector<4x256xf32>, vector<4x256xf32> -> vector<4x256xf32>
    %67 = arith.addf %63, %66 : vector<4x256xf32>
    %c255_i32 = arith.constant 255 : i32
    %68 = tpu.dynamic_rotate %1 by %c255_i32 dim 1 : vector<4x256xf32>, i32 -> vector<4x256xf32>
    %c15_i32_34 = arith.constant 15 : i32
    %69 = vector.broadcast %c15_i32_34 : i32 to vector<4x256xi32>
    %70 = arith.cmpi slt, %18, %69 : vector<4x256xi32>
    %cst_35 = arith.constant 0.000000e+00 : f32
    %71 = vector.broadcast %cst_35 : f32 to vector<4x256xf32>
    %72 = arith.select %70, %68, %71 : vector<4x256xi1>, vector<4x256xf32>
    %c5 = arith.constant 5 : index
    %c0_36 = arith.constant 0 : index
    %c0_37 = arith.constant 0 : index
    %73 = vector.load %arg2[%c5, %c0_36, %c0_37] : memref<9x4x4xf32, #tpu.memory_space<vmem>>, vector<1x4x4xf32>
    %74 = vector.shape_cast %73 : vector<1x4x4xf32> to vector<4x4xf32>
    %cst_38 = arith.constant dense<0.000000e+00> : vector<4x256xf32>
    %75 = tpu.matmul %74, %72, %cst_38 {dimension_numbers = #tpu.dot_dimension_numbers<[1], [0], [0], [1], [0, 0, 1, 1], [], []>} : vector<4x4xf32>, vector<4x256xf32>, vector<4x256xf32> -> vector<4x256xf32>
    %76 = arith.addf %67, %75 : vector<4x256xf32>
    %c241_i32 = arith.constant 241 : i32
    %77 = tpu.dynamic_rotate %1 by %c241_i32 dim 1 : vector<4x256xf32>, i32 -> vector<4x256xf32>
    %c240_i32 = arith.constant 240 : i32
    %78 = vector.broadcast %c240_i32 : i32 to vector<4x256xi32>
    %79 = arith.cmpi slt, %2, %78 : vector<4x256xi32>
    %c1_i32_39 = arith.constant 1 : i32
    %80 = vector.broadcast %c1_i32_39 : i32 to vector<4x256xi32>
    %81 = arith.cmpi sge, %18, %80 : vector<4x256xi32>
    %82 = arith.andi %79, %81 : vector<4x256xi1>
    %cst_40 = arith.constant 0.000000e+00 : f32
    %83 = vector.broadcast %cst_40 : f32 to vector<4x256xf32>
    %84 = arith.select %82, %77, %83 : vector<4x256xi1>, vector<4x256xf32>
    %c6 = arith.constant 6 : index
    %c0_41 = arith.constant 0 : index
    %c0_42 = arith.constant 0 : index
    %85 = vector.load %arg2[%c6, %c0_41, %c0_42] : memref<9x4x4xf32, #tpu.memory_space<vmem>>, vector<1x4x4xf32>
    %86 = vector.shape_cast %85 : vector<1x4x4xf32> to vector<4x4xf32>
    %cst_43 = arith.constant dense<0.000000e+00> : vector<4x256xf32>
    %87 = tpu.matmul %86, %84, %cst_43 {dimension_numbers = #tpu.dot_dimension_numbers<[1], [0], [0], [1], [0, 0, 1, 1], [], []>} : vector<4x4xf32>, vector<4x256xf32>, vector<4x256xf32> -> vector<4x256xf32>
    %88 = arith.addf %76, %87 : vector<4x256xf32>
    %c240_i32_44 = arith.constant 240 : i32
    %89 = tpu.dynamic_rotate %1 by %c240_i32_44 dim 1 : vector<4x256xf32>, i32 -> vector<4x256xf32>
    %c240_i32_45 = arith.constant 240 : i32
    %90 = vector.broadcast %c240_i32_45 : i32 to vector<4x256xi32>
    %91 = arith.cmpi slt, %2, %90 : vector<4x256xi32>
    %cst_46 = arith.constant 0.000000e+00 : f32
    %92 = vector.broadcast %cst_46 : f32 to vector<4x256xf32>
    %93 = arith.select %91, %89, %92 : vector<4x256xi1>, vector<4x256xf32>
    %c7 = arith.constant 7 : index
    %c0_47 = arith.constant 0 : index
    %c0_48 = arith.constant 0 : index
    %94 = vector.load %arg2[%c7, %c0_47, %c0_48] : memref<9x4x4xf32, #tpu.memory_space<vmem>>, vector<1x4x4xf32>
    %95 = vector.shape_cast %94 : vector<1x4x4xf32> to vector<4x4xf32>
    %cst_49 = arith.constant dense<0.000000e+00> : vector<4x256xf32>
    %96 = tpu.matmul %95, %93, %cst_49 {dimension_numbers = #tpu.dot_dimension_numbers<[1], [0], [0], [1], [0, 0, 1, 1], [], []>} : vector<4x4xf32>, vector<4x256xf32>, vector<4x256xf32> -> vector<4x256xf32>
    %97 = arith.addf %88, %96 : vector<4x256xf32>
    %c239_i32 = arith.constant 239 : i32
    %98 = tpu.dynamic_rotate %1 by %c239_i32 dim 1 : vector<4x256xf32>, i32 -> vector<4x256xf32>
    %c240_i32_50 = arith.constant 240 : i32
    %99 = vector.broadcast %c240_i32_50 : i32 to vector<4x256xi32>
    %100 = arith.cmpi slt, %2, %99 : vector<4x256xi32>
    %c15_i32_51 = arith.constant 15 : i32
    %101 = vector.broadcast %c15_i32_51 : i32 to vector<4x256xi32>
    %102 = arith.cmpi slt, %18, %101 : vector<4x256xi32>
    %103 = arith.andi %100, %102 : vector<4x256xi1>
    %cst_52 = arith.constant 0.000000e+00 : f32
    %104 = vector.broadcast %cst_52 : f32 to vector<4x256xf32>
    %105 = arith.select %103, %98, %104 : vector<4x256xi1>, vector<4x256xf32>
    %c8 = arith.constant 8 : index
    %c0_53 = arith.constant 0 : index
    %c0_54 = arith.constant 0 : index
    %106 = vector.load %arg2[%c8, %c0_53, %c0_54] : memref<9x4x4xf32, #tpu.memory_space<vmem>>, vector<1x4x4xf32>
    %107 = vector.shape_cast %106 : vector<1x4x4xf32> to vector<4x4xf32>
    %cst_55 = arith.constant dense<0.000000e+00> : vector<4x256xf32>
    %108 = tpu.matmul %107, %105, %cst_55 {dimension_numbers = #tpu.dot_dimension_numbers<[1], [0], [0], [1], [0, 0, 1, 1], [], []>} : vector<4x4xf32>, vector<4x256xf32>, vector<4x256xf32> -> vector<4x256xf32>
    %109 = arith.addf %97, %108 : vector<4x256xf32>
    %c0_56 = arith.constant 0 : index
    %c0_57 = arith.constant 0 : index
    %c0_58 = arith.constant 0 : index
    %110 = vector.load %arg4[%c0_56, %c0_57, %c0_58] : memref<1x4x256xf32, #tpu.memory_space<vmem>>, vector<1x4x256xf32>
    %111 = vector.shape_cast %110 : vector<1x4x256xf32> to vector<4x256xf32>
    %112 = vector.shape_cast %109 : vector<4x256xf32> to vector<1x4x256xf32>
    tpu.vector_store %arg4[%c0_56, %c0_57, %c0_58], %112 {strides = array<i32>} : memref<1x4x256xf32, #tpu.memory_space<vmem>>, vector<1x4x256xf32>,
    return
  }
  func.func @transform_0(%arg0: i32) -> (i32, i32, i32) {
    %c0_i32 = arith.constant 0 : i32
    %c0_i32_0 = arith.constant 0 : i32
    %c0_i32_1 = arith.constant 0 : i32
    return %arg0, %c0_i32, %c0_i32_0 : i32, i32, i32
  }
  func.func @transform_1(%arg0: i32) -> (i32, i32, i32) {
    %c0_i32 = arith.constant 0 : i32
    %c0_i32_0 = arith.constant 0 : i32
    %c0_i32_1 = arith.constant 0 : i32
    %c0_i32_2 = arith.constant 0 : i32
    return %c0_i32, %c0_i32_0, %c0_i32_1 : i32, i32, i32
  }
  func.func @transform_2(%arg0: i32) -> (i32, i32) {
    %c0_i32 = arith.constant 0 : i32
    %c0_i32_0 = arith.constant 0 : i32
    %c0_i32_1 = arith.constant 0 : i32
    return %c0_i32, %c0_i32_0 : i32, i32
  }
  func.func @transform_3(%arg0: i32) -> (i32, i32, i32) {
    %c0_i32 = arith.constant 0 : i32
    %c0_i32_0 = arith.constant 0 : i32
    %c0_i32_1 = arith.constant 0 : i32
    return %arg0, %c0_i32, %c0_i32_0 : i32, i32, i32
  }
}

</mosaic_0001>

<llo_original>
// kernel: tpu_custom_call.1
$region0: #{tpu_custom_call.1}
  #allocation0 [shape = 'u32[]', space=smem, size = 0x4, offset = 0x4, fixed_abs, tag = 'smem constant byte address 0x4 - core index']
  #allocation1 [shape = 'u32[144,128]{1,0:T(1,128)}', space=vmem, size = 0x12000, scoped, tag = 'internal scratch']
  %s0 = inlined_call_operand.vmem [shape: f32[2,4,256], index: 0, kind: input, shape index: {}]
  %s1 = inlined_call_operand.vmem [shape: f32[9,4,4], index: 1, kind: input, shape index: {}]
  %s2 = inlined_call_operand.vmem [shape: f32[4,1], index: 2, kind: input, shape index: {}]
  %s3 = inlined_call_operand.hbm [shape: f32[2,4,256], index: 3, kind: output, shape index: {}]
  %s4 = sld [smem:[#allocation0]]
  $region45: #{tpu_custom_call.1} parent=0
    _
  %s6 = ssub.s32 1, %s4
  %s7 = scalar_select 0, %s6, %s4
  $region1: #{tpu_custom_call.1} parent=0
    #allocation2 [shape = 'u8[8192]{0}', space=vmem, size = 0x2000, scoped, tag = 'output window, operand 0']
    #allocation3 [shape = 's32[2]{0}', space=sflag, size = 0x8, scoped, tag = 'scoped memory for tpu_custom_call.1']
    %8 = vsyncpa [#allocation3], 0
    %s9 = scalar_lea.sflag [#allocation3], 1
    %10 = vsyncpa %s9, 0
    loop: start=0, step=1, limit=4
    $region2: #{tpu_custom_call.1} parent=1 // loop_pre_header
      _
    $region3: #{tpu_custom_call.1} parent=1 // loop_header
      %s12 = sphi 0, %s16
      %p13 = scmp.ge.s32.totalorder %s12, 4
      %s22 = sphi 0, %s24
      %s25 = sphi 0, %s22
      %s26 = sphi 0, %s25
      %s42 = sphi 0, %s26
      %s46 = sphi 0, %s46
      %s48 = sphi 0, %s46
      %s49 = sphi 0, %s48
      %s63 = sphi 0, %s49
      %s67 = sphi 0, %s67
      %s69 = sphi 0, %s67
      %s70 = sphi 0, %s69
      %s84 = sphi 0, %s70
      %s90 = sphi 0, %s92
      %s93 = sphi 0, %s90
      %s94 = sphi 0, %s93
      %s110 = sphi 0, %s94
    $region4: #{tpu_custom_call.1} parent=1 // loop_header_branch
      %15 = sbr.rel (%p13) target = $region8
    $region5: #{tpu_custom_call.1} parent=1 // loop_body
      %s17 = ssub.s32 %s12, 1
      %s18 = ssub.s32 %s12, 2
      %s19 = sadd.s32 %s12, 1
      %s20 = ssub.s32 %s12, %s19
      %p21 = scmp.eq.s32.totalorder %s20, 0
      %s23 = sadd.s32 %s22, 1
      %s24 = scalar_select %p21, %s22, %s23
      %p27 = pneg %p21
      %p28 = scmp.eq.s32.totalorder %s12, 1
      %p29 = por %p27, %p28
      %p30 = scmp.ne.s32.totalorder %s22, %s25
      %p31 = scmp.eq.s32.totalorder %s12, 0
      %p32 = por %p30, %p31
      %p33 = scmp.ne.s32.totalorder %s22, %s25
      %p34 = scmp.eq.s32.totalorder %s17, 1
      %p35 = por %p33, %p34
      %p36 = scmp.ne.s32.totalorder %s25, %s26
      %p37 = scmp.eq.s32.totalorder %s17, 0
      %p38 = por %p36, %p37
      %p39 = scmp.ne.s32.totalorder %s25, %s26
      %p40 = scmp.eq.s32.totalorder %s18, 1
      %p41 = por %p39, %p40
      %p43 = scmp.ne.s32.totalorder %s26, %s42
      %p44 = scmp.eq.s32.totalorder %s18, 0
      %p45 = por %p43, %p44
      %s47 = sadd.s32 %s46, 1
      %p50 = scmp.eq.s32.totalorder %s12, 1
      %p51 = scmp.ne.s32.totalorder %s46, %s48
      %p52 = scmp.eq.s32.totalorder %s12, 0
      %p53 = por %p51, %p52
      %p54 = scmp.ne.s32.totalorder %s46, %s48
      %p55 = scmp.eq.s32.totalorder %s17, 1
      %p56 = por %p54, %p55
      %p57 = scmp.ne.s32.totalorder %s48, %s49
      %p58 = scmp.eq.s32.totalorder %s17, 0
      %p59 = por %p57, %p58
      %p60 = scmp.ne.s32.totalorder %s48, %s49
      %p61 = scmp.eq.s32.totalorder %s18, 1
      %p62 = por %p60, %p61
      %p64 = scmp.ne.s32.totalorder %s49, %s63
      %p65 = scmp.eq.s32.totalorder %s18, 0
      %p66 = por %p64, %p65
      %s68 = sadd.s32 %s67, 1
      %p71 = scmp.eq.s32.totalorder %s12, 1
      %p72 = scmp.ne.s32.totalorder %s67, %s69
      %p73 = scmp.eq.s32.totalorder %s12, 0
      %p74 = por %p72, %p73
      %p75 = scmp.ne.s32.totalorder %s67, %s69
      %p76 = scmp.eq.s32.totalorder %s17, 1
      %p77 = por %p75, %p76
      %p78 = scmp.ne.s32.totalorder %s69, %s70
      %p79 = scmp.eq.s32.totalorder %s17, 0
      %p80 = por %p78, %p79
      %p81 = scmp.ne.s32.totalorder %s69, %s70
      %p82 = scmp.eq.s32.totalorder %s18, 1
      %p83 = por %p81, %p82
      %p85 = scmp.ne.s32.totalorder %s70, %s84
      %p86 = scmp.eq.s32.totalorder %s18, 0
      %p87 = por %p85, %p86
      %s88 = ssub.s32 %s12, %s19
      %p89 = scmp.eq.s32.totalorder %s88, 0
      %s91 = sadd.s32 %s90, 1
      %s92 = scalar_select %p89, %s90, %s91
      %p95 = pneg %p89
      %p96 = scmp.eq.s32.totalorder %s12, 1
      %p97 = por %p95, %p96
      %p98 = scmp.ne.s32.totalorder %s90, %s93
      %p99 = scmp.eq.s32.totalorder %s12, 0
      %p100 = por %p98, %p99
      %p101 = scmp.ne.s32.totalorder %s90, %s93
      %p102 = scmp.eq.s32.totalorder %s17, 1
      %p103 = por %p101, %p102
      %p104 = scmp.ne.s32.totalorder %s93, %s94
      %p105 = scmp.eq.s32.totalorder %s17, 0
      %p106 = por %p104, %p105
      %p107 = scmp.ne.s32.totalorder %s93, %s94
      %p108 = scmp.eq.s32.totalorder %s18, 1
      %p109 = por %p107, %p108
      %p111 = scmp.ne.s32.totalorder %s94, %s110
      %p112 = scmp.eq.s32.totalorder %s18, 0
      %p113 = por %p111, %p112
      %p114 = scmp.le.s32.totalorder 1, %s12
      %p115 = scmp.lt.s32.totalorder %s12, 3
      %p116 = pnand %p114, %p115
      %p117 = pneg %p116
      // Predicated region
      $region9: #{tpu_custom_call.1} parent=5 // pred_check
        _
      $region10: #{tpu_custom_call.1} parent=5 // pred_check_branch
        %119 = sbr.rel (%p116) target = $region12
      $region11: #{tpu_custom_call.1} parent=5 // pred_region
        %s120 = ssub.s32 %s12, 1
        // Predicated region
        $region13: #{tpu_custom_call.1} parent=11 // pred_check
          %p121 = pneg %p59
        $region14: #{tpu_custom_call.1} parent=11 // pred_check_branch
          %123 = sbr.rel (%p121) target = $region16
        $region15: #{tpu_custom_call.1} parent=11 // pred_region
          _
        $region16: #{tpu_custom_call.1} parent=11 // pred_fallthru
          _
        // Predicated region
        $region17: #{tpu_custom_call.1} parent=11 // pred_check
          %p124 = pneg %p80
        $region18: #{tpu_custom_call.1} parent=11 // pred_check_branch
          %126 = sbr.rel (%p124) target = $region20
        $region19: #{tpu_custom_call.1} parent=11 // pred_region
          _
        $region20: #{tpu_custom_call.1} parent=11 // pred_fallthru
          _
      $region12: #{tpu_custom_call.1} parent=5 // pred_fallthru
        _
      %p127 = scmp.lt.s32.totalorder %s12, 2
      // Predicated region
      $region21: #{tpu_custom_call.1} parent=5 // pred_check
        %p128 = pneg %p127
      $region22: #{tpu_custom_call.1} parent=5 // pred_check_branch
        %130 = sbr.rel (%p128) target = $region24
      $region23: #{tpu_custom_call.1} parent=5 // pred_region
        // Predicated region
        $region25: #{tpu_custom_call.1} parent=23 // pred_check
          %p131 = pneg %p32
        $region26: #{tpu_custom_call.1} parent=23 // pred_check_branch
          %133 = sbr.rel (%p131) target = $region28
        $region27: #{tpu_custom_call.1} parent=23 // pred_region
          %p134 = scmp.lt.s32.totalorder %s12, 1
          %s135 = scalar_select %p134, %s12, 1
          %s136 = smul.addr %s135, 2
          %s137 = smul.addr %s136, 4
          %s138 = scalar_lea.vmem %s0, %s137
        $region28: #{tpu_custom_call.1} parent=23 // pred_fallthru
          _
      $region24: #{tpu_custom_call.1} parent=5 // pred_fallthru
        _
      %p139 = scmp.le.s32.totalorder 1, %s12
      %p140 = scmp.lt.s32.totalorder %s12, 3
      %p141 = pnand %p139, %p140
      %p142 = pneg %p141
      // Predicated region
      $region29: #{tpu_custom_call.1} parent=5 // pred_check
        _
      $region30: #{tpu_custom_call.1} parent=5 // pred_check_branch
        %144 = sbr.rel (%p141) target = $region32
      $region31: #{tpu_custom_call.1} parent=5 // pred_region
        %s145 = ssub.s32 %s12, 1
        %p146 = scmp.lt.s32.totalorder %s17, 1
        %s147 = scalar_select %p146, %s17, 1
        %s148 = smul.addr %s147, 2
        %s149 = smul.addr %s148, 4
        %s150 = scalar_lea.vmem %s0, %s149
        %p151 = pneg %p38
        %p152 = pneg %p35
        %p153 = pneg %p59
        %p154 = pneg %p56
        %p155 = pneg %p80
        %p156 = pneg %p77
        %p157 = pneg %p106
        %p158 = pneg %p103
        %s159 = sand.u32 %s93, 1
        %s160 = scalar_lea.sflag [#allocation3], %s159
        %s161 = sand.u32 %s93, 1
        %s162 = smul.addr %s161, 8
        %s163 = scalar_lea.vmem [#allocation2], %s162
        %p164 = scmp.lt.s32.totalorder %s17, 1
        %s165 = scalar_select %p164, %s17, 1
        %s166 = smul.addr %s165, 2
        %s167 = smul.addr %s166, 4
        %s168 = scalar_lea.vmem %s0, %s167
        %v169 = vld [vmem:[%s168] sm:$0xff]
        %v170 = vlaneseq
        %v171 = vand.u32 %v170, 127
        %v172 = vadd.s32 %v171, 128
        %vm173 = vcmp.lt.s32.totalorder %v171, 0
        %v174 = vsub.s32 0, %v171
        %v175 = vsel %vm173, %v174, %v171
        %v176 = vshrl.u32 %v175, 4
        %v177 = vand.u32 %v175, 15
        %v178 = vsub.s32 0, %v177
        %v179 = vsel %vm173, %v178, %v177
        %vm180 = vcmp.lt.s32.totalorder %v172, 0
        %v181 = vsub.s32 0, %v172
        %v182 = vsel %vm180, %v181, %v172
        %v183 = vshrl.u32 %v182, 4
        %v184 = vand.u32 %v182, 15
        %v185 = vsub.s32 0, %v184
        %v186 = vsel %vm180, %v185, %v184
        %vm187 = vcmp.ne.s32.totalorder %v179, 0
        %vm188 = vcmp.ne.s32.totalorder %v186, 0
        %vm189 = vcmp.lt.s32.totalorder %v179, 0
        %vm190 = vcmp.lt.s32.totalorder %v186, 0
        %vm191 = vmand %vm189, %vm187
        %vm192 = vmand %vm190, %vm188
        %v193 = vadd.s32 %v179, 16
        %v194 = vadd.s32 %v186, 16
        %v195 = vsel %vm191, %v193, %v179
        %v196 = vsel %vm192, %v194, %v186
        %v197 = vld [vmem:[%s2] sm:$0xf]
        %199 = vset.pattern.permute.xlu0 0
        %200 = vperm.xlu0 %199, %v197
        %v201 = vpop.permute.xlu0 %200
        %v203 = vunpack.c.l.s4 839922192
        %v204 = vunpack.c.0.s8 %v203
        %v205 = vlaneseq
        %v206 = vshrl.u32 %v205, 7
        %v207 = vsub.s32 %v204, %v206
        %v208 = vrot.slane %v201, %v207
        %v210 = vadd.f32 %v169, %v208
        %v212 = vcombine.high %v169, %v169
        %214 = vrot.lane.b32.xlu0 %v169, 17
        %v215 = vpop.permute.xlu0 %214
        %216 = vrot.lane.b32.xlu0 %v212, 17
        %v217 = vpop.permute.xlu0 %216
        %vm218 = vcmp.lt.s32.totalorder %v171, 17
        %v219 = vsel %vm218, %v215, %v217
        %v220 = vsel %vm218, %v217, %v215
        %vm221 = vcmp.ge.s32.totalorder %v171, 16
        %vm222 = vcmp.ge.s32.totalorder %v172, 16
        %vm223 = vcmp.ge.s32.totalorder %v195, 1
        %vm224 = vcmp.ge.s32.totalorder %v196, 1
        %vm225 = vmand %vm221, %vm223
        %vm226 = vmand %vm222, %vm224
        %v227 = vsel %vm225, %v220, 0.0
        %v228 = vsel %vm226, %v219, 0.0
        %v229 = vld [vmem:[%s1] sm:$0xf]
        %vm230 = vcmask 31744
        %v232 = vsel %vm230, %v229, 0
        %vm234 = vcmask 1043456
        %v236 = vsel %vm234, %v227, 0
        %v239 = vsel %vm234, %v228, 0
        %241 = vmatprep.subr.mxu0 0.0
        %242 = vmatpush1.msra.mxu0 0.0
        %243 = vmatprep.subr.mxu0 0.0
        %244 = vmatpush1.msra.mxu0 0.0
        %245 = vmatprep.subr.mxu0 0.0
        %246 = vmatpush1.msra.mxu0 0.0
        %247 = vmatprep.subr.mxu0 0.0
        %248 = vmatpush1.msra.mxu0 0.0
        %249 = vmatprep.subr.mxu0 0.0
        %250 = vmatpush1.msra.mxu0 0.0
        %251 = vmatprep.subr.mxu0 0.0
        %252 = vmatpush1.msra.mxu0 0.0
        %253 = vmatprep.subr.mxu0 0.0
        %254 = vmatpush1.msra.mxu0 0.0
        %255 = vmatprep.subr.mxu0 0.0
        %256 = vmatpush1.msra.mxu0 0.0
        %257 = vmatprep.subr.mxu0 0.0
        %258 = vmatpush1.msra.mxu0 0.0
        %259 = vmatprep.subr.mxu0 0.0
        %260 = vmatpush1.msra.mxu0 0.0
        %261 = vmatprep.subr.mxu0 0.0
        %262 = vmatpush1.msra.mxu0 0.0
        %263 = vmatprep.subr.mxu0 0.0
        %264 = vmatpush1.msra.mxu0 0.0
        %265 = vmatprep.subr.mxu0 0.0
        %266 = vmatpush1.msra.mxu0 0.0
        %267 = vmatprep.subr.mxu0 0.0
        %268 = vmatpush1.msra.mxu0 0.0
        %269 = vmatprep.subr.mxu0 0.0
        %270 = vmatpush1.msra.mxu0 0.0
        %271 = vmatprep.subr.mxu0 %v239
        %272 = vmatpush1.msra.mxu0 %v236
        %273 = vmatprep.subr.mxu0 0.0
        %274 = vmatpush2.msra.mxu0 0.0
        %275 = vmatprep.subr.mxu0 0.0
        %276 = vmatpush2.msra.mxu0 0.0
        %277 = vmatprep.subr.mxu0 0.0
        %278 = vmatpush2.msra.mxu0 0.0
        %279 = vmatprep.subr.mxu0 0.0
        %280 = vmatpush2.msra.mxu0 0.0
        %281 = vmatprep.subr.mxu0 0.0
        %282 = vmatpush2.msra.mxu0 0.0
        %283 = vmatprep.subr.mxu0 0.0
        %284 = vmatpush2.msra.mxu0 0.0
        %285 = vmatprep.subr.mxu0 0.0
        %286 = vmatpush2.msra.mxu0 0.0
        %287 = vmatprep.subr.mxu0 0.0
        %288 = vmatpush2.msra.mxu0 0.0
        %289 = vmatprep.subr.mxu0 0.0
        %290 = vmatpush2.msra.mxu0 0.0
        %291 = vmatprep.subr.mxu0 0.0
        %292 = vmatpush2.msra.mxu0 0.0
        %293 = vmatprep.subr.mxu0 0.0
        %294 = vmatpush2.msra.mxu0 0.0
        %295 = vmatprep.subr.mxu0 0.0
        %296 = vmatpush2.msra.mxu0 0.0
        %297 = vmatprep.subr.mxu0 0.0
        %298 = vmatpush2.msra.mxu0 0.0
        %299 = vmatprep.subr.mxu0 0.0
        %300 = vmatpush2.msra.mxu0 0.0
        %301 = vmatprep.subr.mxu0 0.0
        %302 = vmatpush2.msra.mxu0 0.0
        %303 = vmatprep.subr.mxu0 0.0
        %304 = vmatpush2.msra.mxu0 0.0
        %305 = vmatprep.mubr.f32.mxu0 0.0
        %306 = vmatmul.mubr.f32.gmra.mxu0 %v232
        %v307 = vpop.f32.mrf.mxu0
        %v308 = vadd.f32 0.0, %v307
        %v309 = vpop.f32.mrf.mxu0
        %v310 = vadd.f32 0.0, %v309
        %311 = vdwg.mxu0
        %v314 = vcombine.low %v308, %v310
        %v316 = vadd.f32 %v210, %v314
        %317 = vrot.lane.b32.xlu0 %v169, 16
        %v318 = vpop.permute.xlu0 %317
        %319 = vrot.lane.b32.xlu0 %v212, 16
        %v320 = vpop.permute.xlu0 %319
        %vm321 = vcmp.lt.s32.totalorder %v171, 16
        %v322 = vsel %vm321, %v318, %v320
        %v323 = vsel %vm321, %v320, %v318
        %v324 = vsel %vm221, %v323, 0.0
        %v325 = vsel %vm222, %v322, 0.0
        %s326 = scalar_lea.vmem %s1, 4
        %v327 = vld [vmem:[%s326] sm:$0xf]
        %v329 = vsel %vm230, %v327, 0
        %v332 = vsel %vm234, %v324, 0
        %v335 = vsel %vm234, %v325, 0
        %337 = vmatprep.subr.mxu0 0.0
        %338 = vmatpush1.msra.mxu0 0.0
        %339 = vmatprep.subr.mxu0 0.0
        %340 = vmatpush1.msra.mxu0 0.0
        %341 = vmatprep.subr.mxu0 0.0
        %342 = vmatpush1.msra.mxu0 0.0
        %343 = vmatprep.subr.mxu0 0.0
        %344 = vmatpush1.msra.mxu0 0.0
        %345 = vmatprep.subr.mxu0 0.0
        %346 = vmatpush1.msra.mxu0 0.0
        %347 = vmatprep.subr.mxu0 0.0
        %348 = vmatpush1.msra.mxu0 0.0
        %349 = vmatprep.subr.mxu0 0.0
        %350 = vmatpush1.msra.mxu0 0.0
        %351 = vmatprep.subr.mxu0 0.0
        %352 = vmatpush1.msra.mxu0 0.0
        %353 = vmatprep.subr.mxu0 0.0
        %354 = vmatpush1.msra.mxu0 0.0
        %355 = vmatprep.subr.mxu0 0.0
        %356 = vmatpush1.msra.mxu0 0.0
        %357 = vmatprep.subr.mxu0 0.0
        %358 = vmatpush1.msra.mxu0 0.0
        %359 = vmatprep.subr.mxu0 0.0
        %360 = vmatpush1.msra.mxu0 0.0
        %361 = vmatprep.subr.mxu0 0.0
        %362 = vmatpush1.msra.mxu0 0.0
        %363 = vmatprep.subr.mxu0 0.0
        %364 = vmatpush1.msra.mxu0 0.0
        %365 = vmatprep.subr.mxu0 0.0
        %366 = vmatpush1.msra.mxu0 0.0
        %367 = vmatprep.subr.mxu0 %v335
        %368 = vmatpush1.msra.mxu0 %v332
        %369 = vmatprep.subr.mxu0 0.0
        %370 = vmatpush2.msra.mxu0 0.0
        %371 = vmatprep.subr.mxu0 0.0
        %372 = vmatpush2.msra.mxu0 0.0
        %373 = vmatprep.subr.mxu0 0.0
        %374 = vmatpush2.msra.mxu0 0.0
        %375 = vmatprep.subr.mxu0 0.0
        %376 = vmatpush2.msra.mxu0 0.0
        %377 = vmatprep.subr.mxu0 0.0
        %378 = vmatpush2.msra.mxu0 0.0
        %379 = vmatprep.subr.mxu0 0.0
        %380 = vmatpush2.msra.mxu0 0.0
        %381 = vmatprep.subr.mxu0 0.0
        %382 = vmatpush2.msra.mxu0 0.0
        %383 = vmatprep.subr.mxu0 0.0
        %384 = vmatpush2.msra.mxu0 0.0
        %385 = vmatprep.subr.mxu0 0.0
        %386 = vmatpush2.msra.mxu0 0.0
        %387 = vmatprep.subr.mxu0 0.0
        %388 = vmatpush2.msra.mxu0 0.0
        %389 = vmatprep.subr.mxu0 0.0
        %390 = vmatpush2.msra.mxu0 0.0
        %391 = vmatprep.subr.mxu0 0.0
        %392 = vmatpush2.msra.mxu0 0.0
        %393 = vmatprep.subr.mxu0 0.0
        %394 = vmatpush2.msra.mxu0 0.0
        %395 = vmatprep.subr.mxu0 0.0
        %396 = vmatpush2.msra.mxu0 0.0
        %397 = vmatprep.subr.mxu0 0.0
        %398 = vmatpush2.msra.mxu0 0.0
        %399 = vmatprep.subr.mxu0 0.0
        %400 = vmatpush2.msra.mxu0 0.0
        %401 = vmatprep.mubr.f32.mxu0 0.0
        %402 = vmatmul.mubr.f32.gmra.mxu0 %v329
        %v403 = vpop.f32.mrf.mxu0
        %v404 = vadd.f32 0.0, %v403
        %v405 = vpop.f32.mrf.mxu0
        %v406 = vadd.f32 0.0, %v405
        %407 = vdwg.mxu0
        %v410 = vcombine.low %v404, %v406
        %v412 = vadd.f32 %v316, %v410
        %413 = vrot.lane.b32.xlu0 %v169, 15
        %v414 = vpop.permute.xlu0 %413
        %415 = vrot.lane.b32.xlu0 %v212, 15
        %v416 = vpop.permute.xlu0 %415
        %vm417 = vcmp.lt.s32.totalorder %v171, 15
        %v418 = vsel %vm417, %v414, %v416
        %v419 = vsel %vm417, %v416, %v414
        %vm420 = vcmp.lt.s32.totalorder %v195, 15
        %vm421 = vcmp.lt.s32.totalorder %v196, 15
        %vm422 = vmand %vm221, %vm420
        %vm423 = vmand %vm222, %vm421
        %v424 = vsel %vm422, %v419, 0.0
        %v425 = vsel %vm423, %v418, 0.0
        %s426 = scalar_lea.vmem %s1, 8
        %v427 = vld [vmem:[%s426] sm:$0xf]
        %v429 = vsel %vm230, %v427, 0
        %v432 = vsel %vm234, %v424, 0
        %v435 = vsel %vm234, %v425, 0
        %437 = vmatprep.subr.mxu0 0.0
        %438 = vmatpush1.msra.mxu0 0.0
        %439 = vmatprep.subr.mxu0 0.0
        %440 = vmatpush1.msra.mxu0 0.0
        %441 = vmatprep.subr.mxu0 0.0
        %442 = vmatpush1.msra.mxu0 0.0
        %443 = vmatprep.subr.mxu0 0.0
        %444 = vmatpush1.msra.mxu0 0.0
        %445 = vmatprep.subr.mxu0 0.0
        %446 = vmatpush1.msra.mxu0 0.0
        %447 = vmatprep.subr.mxu0 0.0
        %448 = vmatpush1.msra.mxu0 0.0
        %449 = vmatprep.subr.mxu0 0.0
        %450 = vmatpush1.msra.mxu0 0.0
        %451 = vmatprep.subr.mxu0 0.0
        %452 = vmatpush1.msra.mxu0 0.0
        %453 = vmatprep.subr.mxu0 0.0
        %454 = vmatpush1.msra.mxu0 0.0
        %455 = vmatprep.subr.mxu0 0.0
        %456 = vmatpush1.msra.mxu0 0.0
        %457 = vmatprep.subr.mxu0 0.0
        %458 = vmatpush1.msra.mxu0 0.0
        %459 = vmatprep.subr.mxu0 0.0
        %460 = vmatpush1.msra.mxu0 0.0
        %461 = vmatprep.subr.mxu0 0.0
        %462 = vmatpush1.msra.mxu0 0.0
        %463 = vmatprep.subr.mxu0 0.0
        %464 = vmatpush1.msra.mxu0 0.0
        %465 = vmatprep.subr.mxu0 0.0
        %466 = vmatpush1.msra.mxu0 0.0
        %467 = vmatprep.subr.mxu0 %v435
        %468 = vmatpush1.msra.mxu0 %v432
        %469 = vmatprep.subr.mxu0 0.0
        %470 = vmatpush2.msra.mxu0 0.0
        %471 = vmatprep.subr.mxu0 0.0
        %472 = vmatpush2.msra.mxu0 0.0
        %473 = vmatprep.subr.mxu0 0.0
        %474 = vmatpush2.msra.mxu0 0.0
        %475 = vmatprep.subr.mxu0 0.0
        %476 = vmatpush2.msra.mxu0 0.0
        %477 = vmatprep.subr.mxu0 0.0
        %478 = vmatpush2.msra.mxu0 0.0
        %479 = vmatprep.subr.mxu0 0.0
        %480 = vmatpush2.msra.mxu0 0.0
        %481 = vmatprep.subr.mxu0 0.0
        %482 = vmatpush2.msra.mxu0 0.0
        %483 = vmatprep.subr.mxu0 0.0
        %484 = vmatpush2.msra.mxu0 0.0
        %485 = vmatprep.subr.mxu0 0.0
        %486 = vmatpush2.msra.mxu0 0.0
        %487 = vmatprep.subr.mxu0 0.0
        %488 = vmatpush2.msra.mxu0 0.0
        %489 = vmatprep.subr.mxu0 0.0
        %490 = vmatpush2.msra.mxu0 0.0
        %491 = vmatprep.subr.mxu0 0.0
        %492 = vmatpush2.msra.mxu0 0.0
        %493 = vmatprep.subr.mxu0 0.0
        %494 = vmatpush2.msra.mxu0 0.0
        %495 = vmatprep.subr.mxu0 0.0
        %496 = vmatpush2.msra.mxu0 0.0
        %497 = vmatprep.subr.mxu0 0.0
        %498 = vmatpush2.msra.mxu0 0.0
        %499 = vmatprep.subr.mxu0 0.0
        %500 = vmatpush2.msra.mxu0 0.0
        %501 = vmatprep.mubr.f32.mxu0 0.0
        %502 = vmatmul.mubr.f32.gmra.mxu0 %v429
        %v503 = vpop.f32.mrf.mxu0
        %v504 = vadd.f32 0.0, %v503
        %v505 = vpop.f32.mrf.mxu0
        %v506 = vadd.f32 0.0, %v505
        %507 = vdwg.mxu0
        %v510 = vcombine.low %v504, %v506
        %v512 = vadd.f32 %v412, %v510
        %513 = vrot.lane.b32.xlu0 %v169, 1
        %v514 = vpop.permute.xlu0 %513
        %515 = vrot.lane.b32.xlu0 %v212, 1
        %v516 = vpop.permute.xlu0 %515
        %vm517 = vcmp.lt.s32.totalorder %v171, 1
        %v518 = vsel %vm517, %v514, %v516
        %v519 = vsel %vm517, %v516, %v514
        %v520 = vsel %vm223, %v519, 0.0
        %v521 = vsel %vm224, %v518, 0.0
        %s522 = scalar_lea.vmem %s1, 12
        %v523 = vld [vmem:[%s522] sm:$0xf]
        %v525 = vsel %vm230, %v523, 0
        %v528 = vsel %vm234, %v520, 0
        %v531 = vsel %vm234, %v521, 0
        %533 = vmatprep.subr.mxu0 0.0
        %534 = vmatpush1.msra.mxu0 0.0
        %535 = vmatprep.subr.mxu0 0.0
        %536 = vmatpush1.msra.mxu0 0.0
        %537 = vmatprep.subr.mxu0 0.0
        %538 = vmatpush1.msra.mxu0 0.0
        %539 = vmatprep.subr.mxu0 0.0
        %540 = vmatpush1.msra.mxu0 0.0
        %541 = vmatprep.subr.mxu0 0.0
        %542 = vmatpush1.msra.mxu0 0.0
        %543 = vmatprep.subr.mxu0 0.0
        %544 = vmatpush1.msra.mxu0 0.0
        %545 = vmatprep.subr.mxu0 0.0
        %546 = vmatpush1.msra.mxu0 0.0
        %547 = vmatprep.subr.mxu0 0.0
        %548 = vmatpush1.msra.mxu0 0.0
        %549 = vmatprep.subr.mxu0 0.0
        %550 = vmatpush1.msra.mxu0 0.0
        %551 = vmatprep.subr.mxu0 0.0
        %552 = vmatpush1.msra.mxu0 0.0
        %553 = vmatprep.subr.mxu0 0.0
        %554 = vmatpush1.msra.mxu0 0.0
        %555 = vmatprep.subr.mxu0 0.0
        %556 = vmatpush1.msra.mxu0 0.0
        %557 = vmatprep.subr.mxu0 0.0
        %558 = vmatpush1.msra.mxu0 0.0
        %559 = vmatprep.subr.mxu0 0.0
        %560 = vmatpush1.msra.mxu0 0.0
        %561 = vmatprep.subr.mxu0 0.0
        %562 = vmatpush1.msra.mxu0 0.0
        %563 = vmatprep.subr.mxu0 %v531
        %564 = vmatpush1.msra.mxu0 %v528
        %565 = vmatprep.subr.mxu0 0.0
        %566 = vmatpush2.msra.mxu0 0.0
        %567 = vmatprep.subr.mxu0 0.0
        %568 = vmatpush2.msra.mxu0 0.0
        %569 = vmatprep.subr.mxu0 0.0
        %570 = vmatpush2.msra.mxu0 0.0
        %571 = vmatprep.subr.mxu0 0.0
        %572 = vmatpush2.msra.mxu0 0.0
        %573 = vmatprep.subr.mxu0 0.0
        %574 = vmatpush2.msra.mxu0 0.0
        %575 = vmatprep.subr.mxu0 0.0
        %576 = vmatpush2.msra.mxu0 0.0
        %577 = vmatprep.subr.mxu0 0.0
        %578 = vmatpush2.msra.mxu0 0.0
        %579 = vmatprep.subr.mxu0 0.0
        %580 = vmatpush2.msra.mxu0 0.0
        %581 = vmatprep.subr.mxu0 0.0
        %582 = vmatpush2.msra.mxu0 0.0
        %583 = vmatprep.subr.mxu0 0.0
        %584 = vmatpush2.msra.mxu0 0.0
        %585 = vmatprep.subr.mxu0 0.0
        %586 = vmatpush2.msra.mxu0 0.0
        %587 = vmatprep.subr.mxu0 0.0
        %588 = vmatpush2.msra.mxu0 0.0
        %589 = vmatprep.subr.mxu0 0.0
        %590 = vmatpush2.msra.mxu0 0.0
        %591 = vmatprep.subr.mxu0 0.0
        %592 = vmatpush2.msra.mxu0 0.0
        %593 = vmatprep.subr.mxu0 0.0
        %594 = vmatpush2.msra.mxu0 0.0
        %595 = vmatprep.subr.mxu0 0.0
        %596 = vmatpush2.msra.mxu0 0.0
        %597 = vmatprep.mubr.f32.mxu0 0.0
        %598 = vmatmul.mubr.f32.gmra.mxu0 %v525
        %v599 = vpop.f32.mrf.mxu0
        %v600 = vadd.f32 0.0, %v599
        %v601 = vpop.f32.mrf.mxu0
        %v602 = vadd.f32 0.0, %v601
        %603 = vdwg.mxu0
        %v606 = vcombine.low %v600, %v602
        %v608 = vadd.f32 %v512, %v606
        %s609 = scalar_lea.vmem %s1, 16
        %v610 = vld [vmem:[%s609] sm:$0xf]
        %v612 = vsel %vm230, %v610, 0
        %v614 = vsel %vm234, %v169, 0
        %v616 = vsel %vm234, %v212, 0
        %618 = vmatprep.subr.mxu0 0.0
        %619 = vmatpush1.msra.mxu0 0.0
        %620 = vmatprep.subr.mxu0 0.0
        %621 = vmatpush1.msra.mxu0 0.0
        %622 = vmatprep.subr.mxu0 0.0
        %623 = vmatpush1.msra.mxu0 0.0
        %624 = vmatprep.subr.mxu0 0.0
        %625 = vmatpush1.msra.mxu0 0.0
        %626 = vmatprep.subr.mxu0 0.0
        %627 = vmatpush1.msra.mxu0 0.0
        %628 = vmatprep.subr.mxu0 0.0
        %629 = vmatpush1.msra.mxu0 0.0
        %630 = vmatprep.subr.mxu0 0.0
        %631 = vmatpush1.msra.mxu0 0.0
        %632 = vmatprep.subr.mxu0 0.0
        %633 = vmatpush1.msra.mxu0 0.0
        %634 = vmatprep.subr.mxu0 0.0
        %635 = vmatpush1.msra.mxu0 0.0
        %636 = vmatprep.subr.mxu0 0.0
        %637 = vmatpush1.msra.mxu0 0.0
        %638 = vmatprep.subr.mxu0 0.0
        %639 = vmatpush1.msra.mxu0 0.0
        %640 = vmatprep.subr.mxu0 0.0
        %641 = vmatpush1.msra.mxu0 0.0
        %642 = vmatprep.subr.mxu0 0.0
        %643 = vmatpush1.msra.mxu0 0.0
        %644 = vmatprep.subr.mxu0 0.0
        %645 = vmatpush1.msra.mxu0 0.0
        %646 = vmatprep.subr.mxu0 0.0
        %647 = vmatpush1.msra.mxu0 0.0
        %648 = vmatprep.subr.mxu0 %v616
        %649 = vmatpush1.msra.mxu0 %v614
        %650 = vmatprep.subr.mxu0 0.0
        %651 = vmatpush2.msra.mxu0 0.0
        %652 = vmatprep.subr.mxu0 0.0
        %653 = vmatpush2.msra.mxu0 0.0
        %654 = vmatprep.subr.mxu0 0.0
        %655 = vmatpush2.msra.mxu0 0.0
        %656 = vmatprep.subr.mxu0 0.0
        %657 = vmatpush2.msra.mxu0 0.0
        %658 = vmatprep.subr.mxu0 0.0
        %659 = vmatpush2.msra.mxu0 0.0
        %660 = vmatprep.subr.mxu0 0.0
        %661 = vmatpush2.msra.mxu0 0.0
        %662 = vmatprep.subr.mxu0 0.0
        %663 = vmatpush2.msra.mxu0 0.0
        %664 = vmatprep.subr.mxu0 0.0
        %665 = vmatpush2.msra.mxu0 0.0
        %666 = vmatprep.subr.mxu0 0.0
        %667 = vmatpush2.msra.mxu0 0.0
        %668 = vmatprep.subr.mxu0 0.0
        %669 = vmatpush2.msra.mxu0 0.0
        %670 = vmatprep.subr.mxu0 0.0
        %671 = vmatpush2.msra.mxu0 0.0
        %672 = vmatprep.subr.mxu0 0.0
        %673 = vmatpush2.msra.mxu0 0.0
        %674 = vmatprep.subr.mxu0 0.0
        %675 = vmatpush2.msra.mxu0 0.0
        %676 = vmatprep.subr.mxu0 0.0
        %677 = vmatpush2.msra.mxu0 0.0
        %678 = vmatprep.subr.mxu0 0.0
        %679 = vmatpush2.msra.mxu0 0.0
        %680 = vmatprep.subr.mxu0 0.0
        %681 = vmatpush2.msra.mxu0 0.0
        %682 = vmatprep.mubr.f32.mxu0 0.0
        %683 = vmatmul.mubr.f32.gmra.mxu0 %v612
        %v684 = vpop.f32.mrf.mxu0
        %v685 = vadd.f32 0.0, %v684
        %v686 = vpop.f32.mrf.mxu0
        %v687 = vadd.f32 0.0, %v686
        %688 = vdwg.mxu0
        %v691 = vcombine.low %v685, %v687
        %v693 = vadd.f32 %v608, %v691
        %694 = vrot.lane.b32.xlu0 %v169, 127
        %v695 = vpop.permute.xlu0 %694
        %696 = vrot.lane.b32.xlu0 %v212, 127
        %v697 = vpop.permute.xlu0 %696
        %vm698 = vcmp.lt.s32.totalorder %v171, 127
        %v699 = vsel %vm698, %v695, %v697
        %v700 = vsel %vm698, %v697, %v695
        %v701 = vsel %vm420, %v699, 0.0
        %v702 = vsel %vm421, %v700, 0.0
        %s703 = scalar_lea.vmem %s1, 20
        %v704 = vld [vmem:[%s703] sm:$0xf]
        %v706 = vsel %vm230, %v704, 0
        %v709 = vsel %vm234, %v701, 0
        %v712 = vsel %vm234, %v702, 0
        %714 = vmatprep.subr.mxu0 0.0
        %715 = vmatpush1.msra.mxu0 0.0
        %716 = vmatprep.subr.mxu0 0.0
        %717 = vmatpush1.msra.mxu0 0.0
        %718 = vmatprep.subr.mxu0 0.0
        %719 = vmatpush1.msra.mxu0 0.0
        %720 = vmatprep.subr.mxu0 0.0
        %721 = vmatpush1.msra.mxu0 0.0
        %722 = vmatprep.subr.mxu0 0.0
        %723 = vmatpush1.msra.mxu0 0.0
        %724 = vmatprep.subr.mxu0 0.0
        %725 = vmatpush1.msra.mxu0 0.0
        %726 = vmatprep.subr.mxu0 0.0
        %727 = vmatpush1.msra.mxu0 0.0
        %728 = vmatprep.subr.mxu0 0.0
        %729 = vmatpush1.msra.mxu0 0.0
        %730 = vmatprep.subr.mxu0 0.0
        %731 = vmatpush1.msra.mxu0 0.0
        %732 = vmatprep.subr.mxu0 0.0
        %733 = vmatpush1.msra.mxu0 0.0
        %734 = vmatprep.subr.mxu0 0.0
        %735 = vmatpush1.msra.mxu0 0.0
        %736 = vmatprep.subr.mxu0 0.0
        %737 = vmatpush1.msra.mxu0 0.0
        %738 = vmatprep.subr.mxu0 0.0
        %739 = vmatpush1.msra.mxu0 0.0
        %740 = vmatprep.subr.mxu0 0.0
        %741 = vmatpush1.msra.mxu0 0.0
        %742 = vmatprep.subr.mxu0 0.0
        %743 = vmatpush1.msra.mxu0 0.0
        %744 = vmatprep.subr.mxu0 %v712
        %745 = vmatpush1.msra.mxu0 %v709
        %746 = vmatprep.subr.mxu0 0.0
        %747 = vmatpush2.msra.mxu0 0.0
        %748 = vmatprep.subr.mxu0 0.0
        %749 = vmatpush2.msra.mxu0 0.0
        %750 = vmatprep.subr.mxu0 0.0
        %751 = vmatpush2.msra.mxu0 0.0
        %752 = vmatprep.subr.mxu0 0.0
        %753 = vmatpush2.msra.mxu0 0.0
        %754 = vmatprep.subr.mxu0 0.0
        %755 = vmatpush2.msra.mxu0 0.0
        %756 = vmatprep.subr.mxu0 0.0
        %757 = vmatpush2.msra.mxu0 0.0
        %758 = vmatprep.subr.mxu0 0.0
        %759 = vmatpush2.msra.mxu0 0.0
        %760 = vmatprep.subr.mxu0 0.0
        %761 = vmatpush2.msra.mxu0 0.0
        %762 = vmatprep.subr.mxu0 0.0
        %763 = vmatpush2.msra.mxu0 0.0
        %764 = vmatprep.subr.mxu0 0.0
        %765 = vmatpush2.msra.mxu0 0.0
        %766 = vmatprep.subr.mxu0 0.0
        %767 = vmatpush2.msra.mxu0 0.0
        %768 = vmatprep.subr.mxu0 0.0
        %769 = vmatpush2.msra.mxu0 0.0
        %770 = vmatprep.subr.mxu0 0.0
        %771 = vmatpush2.msra.mxu0 0.0
        %772 = vmatprep.subr.mxu0 0.0
        %773 = vmatpush2.msra.mxu0 0.0
        %774 = vmatprep.subr.mxu0 0.0
        %775 = vmatpush2.msra.mxu0 0.0
        %776 = vmatprep.subr.mxu0 0.0
        %777 = vmatpush2.msra.mxu0 0.0
        %778 = vmatprep.mubr.f32.mxu0 0.0
        %779 = vmatmul.mubr.f32.gmra.mxu0 %v706
        %v780 = vpop.f32.mrf.mxu0
        %v781 = vadd.f32 0.0, %v780
        %v782 = vpop.f32.mrf.mxu0
        %v783 = vadd.f32 0.0, %v782
        %784 = vdwg.mxu0
        %v787 = vcombine.low %v781, %v783
        %v789 = vadd.f32 %v693, %v787
        %790 = vrot.lane.b32.xlu0 %v169, 113
        %v791 = vpop.permute.xlu0 %790
        %792 = vrot.lane.b32.xlu0 %v212, 113
        %v793 = vpop.permute.xlu0 %792
        %vm794 = vcmp.lt.s32.totalorder %v171, 113
        %v795 = vsel %vm794, %v791, %v793
        %v796 = vsel %vm794, %v793, %v791
        %vm797 = vcmp.lt.s32.totalorder %v171, 240
        %vm798 = vcmp.lt.s32.totalorder %v172, 240
        %vm799 = vmand %vm797, %vm223
        %vm800 = vmand %vm798, %vm224
        %v801 = vsel %vm799, %v795, 0.0
        %v802 = vsel %vm800, %v796, 0.0
        %s803 = scalar_lea.vmem %s1, 24
        %v804 = vld [vmem:[%s803] sm:$0xf]
        %v806 = vsel %vm230, %v804, 0
        %v809 = vsel %vm234, %v801, 0
        %v812 = vsel %vm234, %v802, 0
        %814 = vmatprep.subr.mxu0 0.0
        %815 = vmatpush1.msra.mxu0 0.0
        %816 = vmatprep.subr.mxu0 0.0
        %817 = vmatpush1.msra.mxu0 0.0
        %818 = vmatprep.subr.mxu0 0.0
        %819 = vmatpush1.msra.mxu0 0.0
        %820 = vmatprep.subr.mxu0 0.0
        %821 = vmatpush1.msra.mxu0 0.0
        %822 = vmatprep.subr.mxu0 0.0
        %823 = vmatpush1.msra.mxu0 0.0
        %824 = vmatprep.subr.mxu0 0.0
        %825 = vmatpush1.msra.mxu0 0.0
        %826 = vmatprep.subr.mxu0 0.0
        %827 = vmatpush1.msra.mxu0 0.0
        %828 = vmatprep.subr.mxu0 0.0
        %829 = vmatpush1.msra.mxu0 0.0
        %830 = vmatprep.subr.mxu0 0.0
        %831 = vmatpush1.msra.mxu0 0.0
        %832 = vmatprep.subr.mxu0 0.0
        %833 = vmatpush1.msra.mxu0 0.0
        %834 = vmatprep.subr.mxu0 0.0
        %835 = vmatpush1.msra.mxu0 0.0
        %836 = vmatprep.subr.mxu0 0.0
        %837 = vmatpush1.msra.mxu0 0.0
        %838 = vmatprep.subr.mxu0 0.0
        %839 = vmatpush1.msra.mxu0 0.0
        %840 = vmatprep.subr.mxu0 0.0
        %841 = vmatpush1.msra.mxu0 0.0
        %842 = vmatprep.subr.mxu0 0.0
        %843 = vmatpush1.msra.mxu0 0.0
        %844 = vmatprep.subr.mxu0 %v812
        %845 = vmatpush1.msra.mxu0 %v809
        %846 = vmatprep.subr.mxu0 0.0
        %847 = vmatpush2.msra.mxu0 0.0
        %848 = vmatprep.subr.mxu0 0.0
        %849 = vmatpush2.msra.mxu0 0.0
        %850 = vmatprep.subr.mxu0 0.0
        %851 = vmatpush2.msra.mxu0 0.0
        %852 = vmatprep.subr.mxu0 0.0
        %853 = vmatpush2.msra.mxu0 0.0
        %854 = vmatprep.subr.mxu0 0.0
        %855 = vmatpush2.msra.mxu0 0.0
        %856 = vmatprep.subr.mxu0 0.0
        %857 = vmatpush2.msra.mxu0 0.0
        %858 = vmatprep.subr.mxu0 0.0
        %859 = vmatpush2.msra.mxu0 0.0
        %860 = vmatprep.subr.mxu0 0.0
        %861 = vmatpush2.msra.mxu0 0.0
        %862 = vmatprep.subr.mxu0 0.0
        %863 = vmatpush2.msra.mxu0 0.0
        %864 = vmatprep.subr.mxu0 0.0
        %865 = vmatpush2.msra.mxu0 0.0
        %866 = vmatprep.subr.mxu0 0.0
        %867 = vmatpush2.msra.mxu0 0.0
        %868 = vmatprep.subr.mxu0 0.0
        %869 = vmatpush2.msra.mxu0 0.0
        %870 = vmatprep.subr.mxu0 0.0
        %871 = vmatpush2.msra.mxu0 0.0
        %872 = vmatprep.subr.mxu0 0.0
        %873 = vmatpush2.msra.mxu0 0.0
        %874 = vmatprep.subr.mxu0 0.0
        %875 = vmatpush2.msra.mxu0 0.0
        %876 = vmatprep.subr.mxu0 0.0
        %877 = vmatpush2.msra.mxu0 0.0
        %878 = vmatprep.mubr.f32.mxu0 0.0
        %879 = vmatmul.mubr.f32.gmra.mxu0 %v806
        %v880 = vpop.f32.mrf.mxu0
        %v881 = vadd.f32 0.0, %v880
        %v882 = vpop.f32.mrf.mxu0
        %v883 = vadd.f32 0.0, %v882
        %884 = vdwg.mxu0
        %v887 = vcombine.low %v881, %v883
        %v889 = vadd.f32 %v789, %v887
        %890 = vrot.lane.b32.xlu0 %v169, 112
        %v891 = vpop.permute.xlu0 %890
        %892 = vrot.lane.b32.xlu0 %v212, 112
        %v893 = vpop.permute.xlu0 %892
        %vm894 = vcmp.lt.s32.totalorder %v171, 112
        %v895 = vsel %vm894, %v891, %v893
        %v896 = vsel %vm894, %v893, %v891
        %v897 = vsel %vm797, %v895, 0.0
        %v898 = vsel %vm798, %v896, 0.0
        %s899 = scalar_lea.vmem %s1, 28
        %v900 = vld [vmem:[%s899] sm:$0xf]
        %v902 = vsel %vm230, %v900, 0
        %v905 = vsel %vm234, %v897, 0
        %v908 = vsel %vm234, %v898, 0
        %910 = vmatprep.subr.mxu0 0.0
        %911 = vmatpush1.msra.mxu0 0.0
        %912 = vmatprep.subr.mxu0 0.0
        %913 = vmatpush1.msra.mxu0 0.0
        %914 = vmatprep.subr.mxu0 0.0
        %915 = vmatpush1.msra.mxu0 0.0
        %916 = vmatprep.subr.mxu0 0.0
        %917 = vmatpush1.msra.mxu0 0.0
        %918 = vmatprep.subr.mxu0 0.0
        %919 = vmatpush1.msra.mxu0 0.0
        %920 = vmatprep.subr.mxu0 0.0
        %921 = vmatpush1.msra.mxu0 0.0
        %922 = vmatprep.subr.mxu0 0.0
        %923 = vmatpush1.msra.mxu0 0.0
        %924 = vmatprep.subr.mxu0 0.0
        %925 = vmatpush1.msra.mxu0 0.0
        %926 = vmatprep.subr.mxu0 0.0
        %927 = vmatpush1.msra.mxu0 0.0
        %928 = vmatprep.subr.mxu0 0.0
        %929 = vmatpush1.msra.mxu0 0.0
        %930 = vmatprep.subr.mxu0 0.0
        %931 = vmatpush1.msra.mxu0 0.0
        %932 = vmatprep.subr.mxu0 0.0
        %933 = vmatpush1.msra.mxu0 0.0
        %934 = vmatprep.subr.mxu0 0.0
        %935 = vmatpush1.msra.mxu0 0.0
        %936 = vmatprep.subr.mxu0 0.0
        %937 = vmatpush1.msra.mxu0 0.0
        %938 = vmatprep.subr.mxu0 0.0
        %939 = vmatpush1.msra.mxu0 0.0
        %940 = vmatprep.subr.mxu0 %v908
        %941 = vmatpush1.msra.mxu0 %v905
        %942 = vmatprep.subr.mxu0 0.0
        %943 = vmatpush2.msra.mxu0 0.0
        %944 = vmatprep.subr.mxu0 0.0
        %945 = vmatpush2.msra.mxu0 0.0
        %946 = vmatprep.subr.mxu0 0.0
        %947 = vmatpush2.msra.mxu0 0.0
        %948 = vmatprep.subr.mxu0 0.0
        %949 = vmatpush2.msra.mxu0 0.0
        %950 = vmatprep.subr.mxu0 0.0
        %951 = vmatpush2.msra.mxu0 0.0
        %952 = vmatprep.subr.mxu0 0.0
        %953 = vmatpush2.msra.mxu0 0.0
        %954 = vmatprep.subr.mxu0 0.0
        %955 = vmatpush2.msra.mxu0 0.0
        %956 = vmatprep.subr.mxu0 0.0
        %957 = vmatpush2.msra.mxu0 0.0
        %958 = vmatprep.subr.mxu0 0.0
        %959 = vmatpush2.msra.mxu0 0.0
        %960 = vmatprep.subr.mxu0 0.0
        %961 = vmatpush2.msra.mxu0 0.0
        %962 = vmatprep.subr.mxu0 0.0
        %963 = vmatpush2.msra.mxu0 0.0
        %964 = vmatprep.subr.mxu0 0.0
        %965 = vmatpush2.msra.mxu0 0.0
        %966 = vmatprep.subr.mxu0 0.0
        %967 = vmatpush2.msra.mxu0 0.0
        %968 = vmatprep.subr.mxu0 0.0
        %969 = vmatpush2.msra.mxu0 0.0
        %970 = vmatprep.subr.mxu0 0.0
        %971 = vmatpush2.msra.mxu0 0.0
        %972 = vmatprep.subr.mxu0 0.0
        %973 = vmatpush2.msra.mxu0 0.0
        %974 = vmatprep.mubr.f32.mxu0 0.0
        %975 = vmatmul.mubr.f32.gmra.mxu0 %v902
        %v976 = vpop.f32.mrf.mxu0
        %v977 = vadd.f32 0.0, %v976
        %v978 = vpop.f32.mrf.mxu0
        %v979 = vadd.f32 0.0, %v978
        %980 = vdwg.mxu0
        %v983 = vcombine.low %v977, %v979
        %v985 = vadd.f32 %v889, %v983
        %986 = vrot.lane.b32.xlu0 %v169, 111
        %v987 = vpop.permute.xlu0 %986
        %988 = vrot.lane.b32.xlu0 %v212, 111
        %v989 = vpop.permute.xlu0 %988
        %vm990 = vcmp.lt.s32.totalorder %v171, 111
        %v991 = vsel %vm990, %v987, %v989
        %v992 = vsel %vm990, %v989, %v987
        %vm993 = vmand %vm797, %vm420
        %vm994 = vmand %vm798, %vm421
        %v995 = vsel %vm993, %v991, 0.0
        %v996 = vsel %vm994, %v992, 0.0
        %s997 = scalar_lea.vmem %s1, 32
        %v998 = vld [vmem:[%s997] sm:$0xf]
        %v1000 = vsel %vm230, %v998, 0
        %v1003 = vsel %vm234, %v995, 0
        %v1006 = vsel %vm234, %v996, 0
        %1008 = vmatprep.subr.mxu0 0.0
        %1009 = vmatpush1.msra.mxu0 0.0
        %1010 = vmatprep.subr.mxu0 0.0
        %1011 = vmatpush1.msra.mxu0 0.0
        %1012 = vmatprep.subr.mxu0 0.0
        %1013 = vmatpush1.msra.mxu0 0.0
        %1014 = vmatprep.subr.mxu0 0.0
        %1015 = vmatpush1.msra.mxu0 0.0
        %1016 = vmatprep.subr.mxu0 0.0
        %1017 = vmatpush1.msra.mxu0 0.0
        %1018 = vmatprep.subr.mxu0 0.0
        %1019 = vmatpush1.msra.mxu0 0.0
        %1020 = vmatprep.subr.mxu0 0.0
        %1021 = vmatpush1.msra.mxu0 0.0
        %1022 = vmatprep.subr.mxu0 0.0
        %1023 = vmatpush1.msra.mxu0 0.0
        %1024 = vmatprep.subr.mxu0 0.0
        %1025 = vmatpush1.msra.mxu0 0.0
        %1026 = vmatprep.subr.mxu0 0.0
        %1027 = vmatpush1.msra.mxu0 0.0
        %1028 = vmatprep.subr.mxu0 0.0
        %1029 = vmatpush1.msra.mxu0 0.0
        %1030 = vmatprep.subr.mxu0 0.0
        %1031 = vmatpush1.msra.mxu0 0.0
        %1032 = vmatprep.subr.mxu0 0.0
        %1033 = vmatpush1.msra.mxu0 0.0
        %1034 = vmatprep.subr.mxu0 0.0
        %1035 = vmatpush1.msra.mxu0 0.0
        %1036 = vmatprep.subr.mxu0 0.0
        %1037 = vmatpush1.msra.mxu0 0.0
        %1038 = vmatprep.subr.mxu0 %v1006
        %1039 = vmatpush1.msra.mxu0 %v1003
        %1040 = vmatprep.subr.mxu0 0.0
        %1041 = vmatpush2.msra.mxu0 0.0
        %1042 = vmatprep.subr.mxu0 0.0
        %1043 = vmatpush2.msra.mxu0 0.0
        %1044 = vmatprep.subr.mxu0 0.0
        %1045 = vmatpush2.msra.mxu0 0.0
        %1046 = vmatprep.subr.mxu0 0.0
        %1047 = vmatpush2.msra.mxu0 0.0
        %1048 = vmatprep.subr.mxu0 0.0
        %1049 = vmatpush2.msra.mxu0 0.0
        %1050 = vmatprep.subr.mxu0 0.0
        %1051 = vmatpush2.msra.mxu0 0.0
        %1052 = vmatprep.subr.mxu0 0.0
        %1053 = vmatpush2.msra.mxu0 0.0
        %1054 = vmatprep.subr.mxu0 0.0
        %1055 = vmatpush2.msra.mxu0 0.0
        %1056 = vmatprep.subr.mxu0 0.0
        %1057 = vmatpush2.msra.mxu0 0.0
        %1058 = vmatprep.subr.mxu0 0.0
        %1059 = vmatpush2.msra.mxu0 0.0
        %1060 = vmatprep.subr.mxu0 0.0
        %1061 = vmatpush2.msra.mxu0 0.0
        %1062 = vmatprep.subr.mxu0 0.0
        %1063 = vmatpush2.msra.mxu0 0.0
        %1064 = vmatprep.subr.mxu0 0.0
        %1065 = vmatpush2.msra.mxu0 0.0
        %1066 = vmatprep.subr.mxu0 0.0
        %1067 = vmatpush2.msra.mxu0 0.0
        %1068 = vmatprep.subr.mxu0 0.0
        %1069 = vmatpush2.msra.mxu0 0.0
        %1070 = vmatprep.subr.mxu0 0.0
        %1071 = vmatpush2.msra.mxu0 0.0
        %1072 = vmatprep.mubr.f32.mxu0 0.0
        %1073 = vmatmul.mubr.f32.gmra.mxu0 %v1000
        %v1074 = vpop.f32.mrf.mxu0
        %v1075 = vadd.f32 0.0, %v1074
        %v1076 = vpop.f32.mrf.mxu0
        %v1077 = vadd.f32 0.0, %v1076
        %1078 = vdwg.mxu0
        %v1081 = vcombine.low %v1075, %v1077
        %v1083 = vadd.f32 %v985, %v1081
        %1084 = vst [vmem:[%s163] sm:$0xff] %v1083
        %s1085 = sand.u32 %s93, 1
        %s1086 = scalar_lea.sflag [#allocation3], %s1085
        %s1087 = sand.u32 %s93, 1
        %s1088 = smul.addr %s1087, 8
        %s1089 = scalar_lea.vmem [#allocation2], %s1088
        // Predicated region
        $region33: #{tpu_custom_call.1} parent=31 // pred_check
          %p1090 = pneg %p103
        $region34: #{tpu_custom_call.1} parent=31 // pred_check_branch
          %1092 = sbr.rel (%p1090) target = $region36
        $region35: #{tpu_custom_call.1} parent=31 // pred_region
          %s1094 = ssub.s32 128, 128
          %1095 = vsyncadd %s1086, %s1094
          %s1096 = smul.addr %s17, 2
          %s1097 = smul.addr %s1096, 64
          %s1098 = scalar_lea.hbm %s3, %s1097
          %s1100 = sshll.u32 %s1089, 4
          %s1101 = int_to_ptr.vmem [resolvable:$true] %s1100
          %1103 = dma.vmem_to_hbm [thread:$0]  %s1101, 128, %s1098, %s1086
        $region36: #{tpu_custom_call.1} parent=31 // pred_fallthru
          _
      $region32: #{tpu_custom_call.1} parent=5 // pred_fallthru
        _
      %p1104 = scmp.le.s32.totalorder 2, %s12
      // Predicated region
      $region37: #{tpu_custom_call.1} parent=5 // pred_check
        %p1105 = pneg %p1104
      $region38: #{tpu_custom_call.1} parent=5 // pred_check_branch
        %1107 = sbr.rel (%p1105) target = $region40
      $region39: #{tpu_custom_call.1} parent=5 // pred_region
        %s1108 = ssub.s32 %s12, 2
        // Predicated region
        $region41: #{tpu_custom_call.1} parent=39 // pred_check
          %p1109 = pneg %p109
        $region42: #{tpu_custom_call.1} parent=39 // pred_check_branch
          %1111 = sbr.rel (%p1109) target = $region44
        $region43: #{tpu_custom_call.1} parent=39 // pred_region
          %s1112 = sand.u32 %s94, 1
          %s1113 = scalar_lea.sflag [#allocation3], %s1112
          %s1114 = sand.u32 %s94, 1
          %s1115 = smul.addr %s1114, 8
          %s1116 = scalar_lea.vmem [#allocation2], %s1115
          %1117 = dma.done %s1113, 128
        $region44: #{tpu_custom_call.1} parent=39 // pred_fallthru
          _
      $region40: #{tpu_custom_call.1} parent=5 // pred_fallthru
        _
    $region6: #{tpu_custom_call.1} parent=1 // loop_footer
      %s16 = sadd.s32 1, %s12
    $region7: #{tpu_custom_call.1} parent=1 // loop_footer_branch
      %11 = sbr.rel target = $region3
    $region8: #{tpu_custom_call.1} parent=1 // loop_exit
      _
    %1118 = vsyncpa [#allocation3], 1
    %s1119 = scalar_lea.sflag [#allocation3], 1
    %1120 = vsyncpa %s1119, 1

</llo_original>
